<compile_context>
chip_gen: v5e
topology: v5e:2x2
jax: 0.10.0
libtpu: 0.0.40
codegen_flags: <defaults>
</compile_context>

<pallas_src>
import jax
import jax.numpy as jnp
from jax.experimental import pallas as pl
from jax.experimental.pallas import tpu as pltpu

HIDDEN = 128


def _round_up(x: int, m: int) -> int:
    return ((x + m - 1) // m) * m


def _cdiv(a: int, b: int) -> int:
    return (a + b - 1) // b


def _critic_kernel(s_ref, a_ref, w1s_ref, w1a_ref, b1_ref, w2_ref, b2_ref,
                   w3_ref, b3_ref, out_ref):
    # s_ref:  (TB, S)      a_ref:  (TB, A)
    # w1s:    (S, 128)     w1a:    (A, 128)     b1: (1, 128)
    # w2:     (128, 128)   b2:     (1, 128)
    # w3:     (1, 128)     b3:     (1,) in SMEM
    # out:    (1, 1, TB)   lane-dense row of per-batch values
    h1 = (jnp.dot(s_ref[...], w1s_ref[...], preferred_element_type=jnp.float32)
          + jnp.dot(a_ref[...], w1a_ref[...], preferred_element_type=jnp.float32)
          + b1_ref[...])
    h1 = jnp.maximum(h1, 0.0)

    h2 = jnp.dot(h1, w2_ref[...], preferred_element_type=jnp.float32) + b2_ref[...]
    h2 = jnp.maximum(h2, 0.0)

    # Final 128 -> 1 layer: contract w3 (1,128) with h2 (TB,128) over the 128
    # axis (same dimension_numbers pattern as q @ k^T in flash attention).
    # The result is already a lane-dense (1, TB) row, so the store is full
    # unmasked vsts and the HBM writeback is one contiguous burst per step.
    val = jax.lax.dot_general(
        w3_ref[...], h2,
        dimension_numbers=(((1,), (1,)), ((), ())),
        preferred_element_type=jnp.float32) + b3_ref[0]
    out_ref[...] = val[None].astype(out_ref.dtype)          # (1, 1, TB)


def critic_forward(state, action, params):
    """Pallas-fused Critic forward.  state: (B, S), action: (B, A) -> (B, 1)."""
    w1, b1, w2, b2, w3, b3 = params
    state = state.astype(jnp.float32)
    action = action.astype(jnp.float32)

    B, S = state.shape
    A = action.shape[1]
    in_dim = S + A

    if B == 0:  # degenerate empty batch
        return jnp.zeros((0, 1), jnp.float32)

    # Split the first-layer weight so the (state, action) concat never
    # materializes in HBM.
    w1s = w1[:S]
    w1a = w1[S:]
    w3_row = w3.reshape(1, HIDDEN)
    b3_smem = b3.reshape(-1).astype(jnp.float32)             # (1,) SMEM scalar

    # ---- batch tiling ------------------------------------------------------
    # TB <= 1024; at least 2 grid steps once B > 512 so both v7x TensorCores
    # get work under dimension_semantics=("parallel",); TB a multiple of 8
    # (sublane) chosen to minimize padding (pad <= 8 * num_tiles rows).
    TB_MAX = 1024
    num_tiles = _cdiv(B, TB_MAX)
    if B > 512:
        num_tiles = max(num_tiles, 2)
    TB = _round_up(_cdiv(B, num_tiles), 8)
    B_pad = num_tiles * TB
    if B_pad != B:
        pad = B_pad - B
        state = jnp.pad(state, ((0, pad), (0, 0)))
        action = jnp.pad(action, ((0, pad), (0, 0)))

    # ---- cost / VMEM sizing -----------------------------------------------
    weight_bytes = 4 * (in_dim * HIDDEN + HIDDEN * HIDDEN + HIDDEN   # w1, w2, w3
                        + 2 * HIDDEN + 1)                            # b1, b2, b3
    cost = pl.CostEstimate(
        flops=2 * B_pad * (in_dim * HIDDEN + HIDDEN * HIDDEN + HIDDEN),
        transcendentals=0,
        bytes_accessed=4 * B_pad * (in_dim + 1) + weight_bytes,
    )

    dbl = 2  # double-buffered pipeline blocks
    vmem_bytes = 4 * (dbl * TB * in_dim                              # input tiles
                      + dbl * TB                                     # output rows
                      + dbl * (in_dim * HIDDEN + HIDDEN * HIDDEN + 3 * HIDDEN)
                      + 4 * TB * HIDDEN)                             # h1/h2 + slack
    vmem_limit = int(min(48 * 1024 * 1024, max(8 * 1024 * 1024, 2 * vmem_bytes)))

    out = pl.pallas_call(
        _critic_kernel,
        out_shape=jax.ShapeDtypeStruct((num_tiles, 1, TB), jnp.float32),
        grid=(num_tiles,),
        in_specs=[
            pl.BlockSpec((TB, S), lambda i: (i, 0)),                # state tile
            pl.BlockSpec((TB, A), lambda i: (i, 0)),                # action tile
            pl.BlockSpec((S, HIDDEN), lambda i: (0, 0)),            # W1[:S]
            pl.BlockSpec((A, HIDDEN), lambda i: (0, 0)),            # W1[S:]
            pl.BlockSpec((1, HIDDEN), lambda i: (0, 0)),            # b1
            pl.BlockSpec((HIDDEN, HIDDEN), lambda i: (0, 0)),       # W2
            pl.BlockSpec((1, HIDDEN), lambda i: (0, 0)),            # b2
            pl.BlockSpec((1, HIDDEN), lambda i: (0, 0)),            # w3 (row)
            pl.BlockSpec(memory_space=pltpu.MemorySpace.SMEM),      # b3 scalar
        ],
        out_specs=pl.BlockSpec((1, 1, TB), lambda i: (i, 0, 0)),
        compiler_params=pltpu.CompilerParams(
            dimension_semantics=("parallel",),
            vmem_limit_bytes=vmem_limit,
        ),
        cost_estimate=cost,
    )(state, action, w1s, w1a, b1, w2, b2, w3_row, b3_smem)

    # (num_tiles, 1, TB) row-major == batch order; drop padded rows.
    return out.reshape(B_pad, 1)[:B]


def init_critic_params(key, in_dim, init_w=3e-3):
    """Deterministic init matching PyTorch nn.Linear defaults + out-layer uniform."""
    k = jax.random.split(key, 6)

    def linear_init(kw, kb, fan_in, fan_out):
        bound = 1.0 / jnp.sqrt(jnp.float32(fan_in))
        w = jax.random.uniform(kw, (fan_in, fan_out), jnp.float32, -bound, bound)
        b = jax.random.uniform(kb, (1, fan_out), jnp.float32, -bound, bound)
        return w, b

    w1, b1 = linear_init(k[0], k[1], in_dim, HIDDEN)
    w2, b2 = linear_init(k[2], k[3], HIDDEN, HIDDEN)
    w3 = jax.random.uniform(k[4], (HIDDEN, 1), jnp.float32, -init_w, init_w)
    b3 = jax.random.uniform(k[5], (1, 1), jnp.float32, -init_w, init_w)
    return (w1, b1, w2, b2, w3, b3)


def critic_ref(state, action, params):
    """Plain-JAX reference for correctness checking."""
    w1, b1, w2, b2, w3, b3 = params
    x = jnp.concatenate([state, action], axis=-1)
    h1 = jnp.maximum(x @ w1 + b1, 0.0)
    h2 = jnp.maximum(h1 @ w2 + b2, 0.0)
    return h2 @ w3 + b3


if __name__ == "__main__":
    key = jax.random.PRNGKey(0)
    k_state, k_action, k_params = jax.random.split(key, 3)

    B, STATE_DIM, ACTION_DIM = 2, 24, 8          # in_dim = 32
    state = jax.random.normal(k_state, (B, STATE_DIM), jnp.float32)
    action = jax.random.normal(k_action, (B, ACTION_DIM), jnp.float32)
    params = init_critic_params(k_params, STATE_DIM + ACTION_DIM)

    out = critic_forward(state, action, params)
    out = jax.block_until_ready(out)

    ref = critic_ref(state, action, params)
    assert out.shape == (B, 1)
    assert jnp.allclose(out, ref, atol=1e-4, rtol=1e-5)

    print("KERNEL_OK")
</pallas_src>

<mosaic_0001>
module attributes {stable_mosaic.version = 11 : i64} {
  func.func @_critic_kernel(%arg0: i32, %arg1: memref<8x24xf32, #tpu.memory_space<vmem>>, %arg2: memref<8x8xf32, #tpu.memory_space<vmem>>, %arg3: memref<24x128xf32, #tpu.memory_space<vmem>>, %arg4: memref<8x128xf32, #tpu.memory_space<vmem>>, %arg5: memref<1x128xf32, #tpu.memory_space<vmem>>, %arg6: memref<128x128xf32, #tpu.memory_space<vmem>>, %arg7: memref<1x128xf32, #tpu.memory_space<vmem>>, %arg8: memref<1x128xf32, #tpu.memory_space<vmem>>, %arg9: memref<1xf32, #tpu.memory_space<smem>>, %arg10: memref<1x1x8xf32, #tpu.memory_space<vmem>>) attributes {dimension_semantics = [#tpu.dimension_semantics<parallel>], iteration_bounds = array<i64: 1>, scalar_prefetch = 0 : i64, scratch_operands = 0 : i64, tpu.core_type = #tpu.core_type<tc>, window_params = [{transform_indices = @transform_0, window_bounds = array<i64: 8, 24>}, {transform_indices = @transform_1, window_bounds = array<i64: 8, 8>}, {pipeline_mode = #tpu.pipeline_mode<synchronous>, transform_indices = @transform_2, window_bounds = array<i64: 24, 128>}, {pipeline_mode = #tpu.pipeline_mode<synchronous>, transform_indices = @transform_3, window_bounds = array<i64: 8, 128>}, {pipeline_mode = #tpu.pipeline_mode<synchronous>, transform_indices = @transform_4, window_bounds = array<i64: 1, 128>}, {pipeline_mode = #tpu.pipeline_mode<synchronous>, transform_indices = @transform_5, window_bounds = array<i64: 128, 128>}, {pipeline_mode = #tpu.pipeline_mode<synchronous>, transform_indices = @transform_6, window_bounds = array<i64: 1, 128>}, {pipeline_mode = #tpu.pipeline_mode<synchronous>, transform_indices = @transform_7, window_bounds = array<i64: 1, 128>}, {transform_indices = @transform_8, window_bounds = array<i64: 1>}, {transform_indices = @transform_9, window_bounds = array<i64: 1, 1, 8>}]} {
    %c0 = arith.constant 0 : index
    %c0_0 = arith.constant 0 : index
    %0 = vector.load %arg1[%c0, %c0_0] : memref<8x24xf32, #tpu.memory_space<vmem>>, vector<8x24xf32>
    %c0_1 = arith.constant 0 : index
    %c0_2 = arith.constant 0 : index
    %1 = vector.load %arg3[%c0_1, %c0_2] : memref<24x128xf32, #tpu.memory_space<vmem>>, vector<24x128xf32>
    %cst = arith.constant dense<0.000000e+00> : vector<8x128xf32>
    %2 = tpu.matmul %0, %1, %cst {dimension_numbers = #tpu.dot_dimension_numbers<[1], [0], [0], [1], [0, 0, 1, 1], [], []>} : vector<8x24xf32>, vector<24x128xf32>, vector<8x128xf32> -> vector<8x128xf32>
    %c0_3 = arith.constant 0 : index
    %c0_4 = arith.constant 0 : index
    %3 = vector.load %arg2[%c0_3, %c0_4] : memref<8x8xf32, #tpu.memory_space<vmem>>, vector<8x8xf32>
    %c0_5 = arith.constant 0 : index
    %c0_6 = arith.constant 0 : index
    %4 = vector.load %arg4[%c0_5, %c0_6] : memref<8x128xf32, #tpu.memory_space<vmem>>, vector<8x128xf32>
    %cst_7 = arith.constant dense<0.000000e+00> : vector<8x128xf32>
    %5 = tpu.matmul %3, %4, %cst_7 {dimension_numbers = #tpu.dot_dimension_numbers<[1], [0], [0], [1], [0, 0, 1, 1], [], []>} : vector<8x8xf32>, vector<8x128xf32>, vector<8x128xf32> -> vector<8x128xf32>
    %6 = arith.addf %2, %5 : vector<8x128xf32>
    %c0_8 = arith.constant 0 : index
    %c0_9 = arith.constant 0 : index
    %7 = vector.load %arg5[%c0_8, %c0_9] : memref<1x128xf32, #tpu.memory_space<vmem>>, vector<1x128xf32>
    %8 = vector.broadcast %7 : vector<1x128xf32> to vector<8x128xf32>
    %9 = arith.addf %6, %8 : vector<8x128xf32>
    %cst_10 = arith.constant 0.000000e+00 : f32
    %10 = vector.broadcast %cst_10 : f32 to vector<8x128xf32>
    %11 = arith.maximumf %9, %10 : vector<8x128xf32>
    %c0_11 = arith.constant 0 : index
    %c0_12 = arith.constant 0 : index
    %12 = vector.load %arg6[%c0_11, %c0_12] : memref<128x128xf32, #tpu.memory_space<vmem>>, vector<128x128xf32>
    %cst_13 = arith.constant dense<0.000000e+00> : vector<8x128xf32>
    %13 = tpu.matmul %11, %12, %cst_13 {dimension_numbers = #tpu.dot_dimension_numbers<[1], [0], [0], [1], [0, 0, 1, 1], [], []>} : vector<8x128xf32>, vector<128x128xf32>, vector<8x128xf32> -> vector<8x128xf32>
    %c0_14 = arith.constant 0 : index
    %c0_15 = arith.constant 0 : index
    %14 = vector.load %arg7[%c0_14, %c0_15] : memref<1x128xf32, #tpu.memory_space<vmem>>, vector<1x128xf32>
    %15 = vector.broadcast %14 : vector<1x128xf32> to vector<8x128xf32>
    %16 = arith.addf %13, %15 : vector<8x128xf32>
    %cst_16 = arith.constant 0.000000e+00 : f32
    %17 = vector.broadcast %cst_16 : f32 to vector<8x128xf32>
    %18 = arith.maximumf %16, %17 : vector<8x128xf32>
    %c0_17 = arith.constant 0 : index
    %c0_18 = arith.constant 0 : index
    %19 = vector.load %arg8[%c0_17, %c0_18] : memref<1x128xf32, #tpu.memory_space<vmem>>, vector<1x128xf32>
    %cst_19 = arith.constant dense<0.000000e+00> : vector<1x8xf32>
    %20 = tpu.matmul %19, %18, %cst_19 {dimension_numbers = #tpu.dot_dimension_numbers<[1], [1], [0], [0], [0, 0, 1, 0], [], []>} : vector<1x128xf32>, vector<8x128xf32>, vector<1x8xf32> -> vector<1x8xf32>
    %c0_20 = arith.constant 0 : index
    %21 = memref.load %arg9[%c0_20] : memref<1xf32, #tpu.memory_space<smem>>
    %22 = vector.broadcast %21 : f32 to vector<1x8xf32>
    %23 = arith.addf %20, %22 : vector<1x8xf32>
    %24 = vector.shape_cast %23 : vector<1x8xf32> to vector<1x1x8xf32>
    %c0_21 = arith.constant 0 : index
    %c0_22 = arith.constant 0 : index
    %c0_23 = arith.constant 0 : index
    %25 = vector.load %arg10[%c0_21, %c0_22, %c0_23] : memref<1x1x8xf32, #tpu.memory_space<vmem>>, vector<1x1x8xf32>
    tpu.vector_store %arg10[%c0_21, %c0_22, %c0_23], %24 {strides = array<i32>} : memref<1x1x8xf32, #tpu.memory_space<vmem>>, vector<1x1x8xf32>,
    return
  }
  func.func @transform_0(%arg0: i32) -> (i32, i32) {
    %c0_i32 = arith.constant 0 : i32
    %c0_i32_0 = arith.constant 0 : i32
    return %arg0, %c0_i32 : i32, i32
  }
  func.func @transform_1(%arg0: i32) -> (i32, i32) {
    %c0_i32 = arith.constant 0 : i32
    %c0_i32_0 = arith.constant 0 : i32
    return %arg0, %c0_i32 : i32, i32
  }
  func.func @transform_2(%arg0: i32) -> (i32, i32) {
    %c0_i32 = arith.constant 0 : i32
    %c0_i32_0 = arith.constant 0 : i32
    %c0_i32_1 = arith.constant 0 : i32
    return %c0_i32, %c0_i32_0 : i32, i32
  }
  func.func @transform_3(%arg0: i32) -> (i32, i32) {
    %c0_i32 = arith.constant 0 : i32
    %c0_i32_0 = arith.constant 0 : i32
    %c0_i32_1 = arith.constant 0 : i32
    return %c0_i32, %c0_i32_0 : i32, i32
  }
  func.func @transform_4(%arg0: i32) -> (i32, i32) {
    %c0_i32 = arith.constant 0 : i32
    %c0_i32_0 = arith.constant 0 : i32
    %c0_i32_1 = arith.constant 0 : i32
    return %c0_i32, %c0_i32_0 : i32, i32
  }
  func.func @transform_5(%arg0: i32) -> (i32, i32) {
    %c0_i32 = arith.constant 0 : i32
    %c0_i32_0 = arith.constant 0 : i32
    %c0_i32_1 = arith.constant 0 : i32
    return %c0_i32, %c0_i32_0 : i32, i32
  }
  func.func @transform_6(%arg0: i32) -> (i32, i32) {
    %c0_i32 = arith.constant 0 : i32
    %c0_i32_0 = arith.constant 0 : i32
    %c0_i32_1 = arith.constant 0 : i32
    return %c0_i32, %c0_i32_0 : i32, i32
  }
  func.func @transform_7(%arg0: i32) -> (i32, i32) {
    %c0_i32 = arith.constant 0 : i32
    %c0_i32_0 = arith.constant 0 : i32
    %c0_i32_1 = arith.constant 0 : i32
    return %c0_i32, %c0_i32_0 : i32, i32
  }
  func.func @transform_8(%arg0: i32) -> i32 {
    %c0_i32 = arith.constant 0 : i32
    %c0_i32_0 = arith.constant 0 : i32
    return %c0_i32 : i32
  }
  func.func @transform_9(%arg0: i32) -> (i32, i32, i32) {
    %c0_i32 = arith.constant 0 : i32
    %c0_i32_0 = arith.constant 0 : i32
    %c0_i32_1 = arith.constant 0 : i32
    return %arg0, %c0_i32, %c0_i32_0 : i32, i32, i32
  }
}

</mosaic_0001>

<llo_original>
// kernel: tpu_custom_call.1
$region0: #{tpu_custom_call.1}
  #allocation0 [shape = 'u32[]', space=smem, size = 0x4, offset = 0x4, fixed_abs, tag = 'smem constant byte address 0x4 - core index']
  #allocation1 [shape = 'u32[72,128]{1,0:T(1,128)}', space=vmem, size = 0x9000, scoped, tag = 'internal scratch']
  #allocation2 [shape = 'f32[1]{0:T(128)S(6)}', space=smem, size = 0x200, scoped, tag = 'scoped memory for tpu_custom_call.1']
  %s0 = inlined_call_operand.hbm [shape: f32[8,24], index: 0, kind: input, shape index: {}]
  %s1 = inlined_call_operand.hbm [shape: f32[8,8], index: 1, kind: input, shape index: {}]
  %s2 = inlined_call_operand.hbm [shape: f32[24,128], index: 2, kind: input, shape index: {}]
  %s3 = inlined_call_operand.hbm [shape: f32[8,128], index: 3, kind: input, shape index: {}]
  %s4 = inlined_call_operand.vmem [shape: f32[1,128], index: 4, kind: input, shape index: {}]
  %s5 = inlined_call_operand.hbm [shape: f32[128,128], index: 5, kind: input, shape index: {}]
  %s6 = inlined_call_operand.vmem [shape: f32[1,128], index: 6, kind: input, shape index: {}]
  %s7 = inlined_call_operand.vmem [shape: f32[1,128], index: 7, kind: input, shape index: {}]
  %s8 = inlined_call_operand.<no memory space> [shape: f32[1], index: 8, kind: input, shape index: {}]
  %s9 = inlined_call_operand.hbm [shape: f32[1,1,8], index: 9, kind: output, shape index: {}]
  %s10 = sld [smem:[#allocation0]]
  $region66: #{tpu_custom_call.1} parent=0
    _
  %s12 = ssub.s32 1, %s10
  %s13 = scalar_select 0, %s12, %s10
  %14 = sst [smem:[#allocation2]] %s8
  $region1: #{tpu_custom_call.1} parent=0
    #allocation3 [shape = 'u8[4096]{0}', space=vmem, size = 0x1000, scoped, tag = 'input window, operand 0, single buffered']
    #allocation4 [shape = 's32[1]{0}', space=sflag, size = 0x4, scoped, tag = 'scoped memory for tpu_custom_call.1']
    #allocation5 [shape = 's32[1]{0}', space=sflag, size = 0x4, scoped, tag = 'scoped memory for tpu_custom_call.1']
    #allocation6 [shape = 'u8[4096]{0}', space=vmem, size = 0x1000, scoped, tag = 'input window, operand 1, single buffered']
    #allocation7 [shape = 's32[1]{0}', space=sflag, size = 0x4, scoped, tag = 'scoped memory for tpu_custom_call.1']
    #allocation8 [shape = 'u8[12288]{0}', space=vmem, size = 0x3000, scoped, tag = 'input window, operand 2, single buffered']
    #allocation9 [shape = 'u8[4096]{0}', space=vmem, size = 0x1000, scoped, tag = 'input window, operand 3, single buffered']
    #allocation10 [shape = 's32[1]{0}', space=sflag, size = 0x4, scoped, tag = 'scoped memory for tpu_custom_call.1']
    #allocation11 [shape = 'u8[65536]{0}', space=vmem, size = 0x10000, scoped, tag = 'input window, operand 5, single buffered']
    #allocation12 [shape = 'u8[512]{0}', space=vmem, size = 0x400, scoped, tag = 'output window, operand 0, single buffered']
    %15 = vsyncpa [#allocation4], 0
    %16 = vsyncpa [#allocation7], 0
    %17 = vsyncpa [#allocation10], 0
    %18 = vsyncpa [#allocation5], 0
    // Predicated region
    $region2: #{tpu_custom_call.1} parent=1 // pred_check
      _
    $region3: #{tpu_custom_call.1} parent=1 // pred_check_branch
      %20 = sbr.rel (0) target = $region5
    $region4: #{tpu_custom_call.1} parent=1 // pred_region
      %22 = vsyncadd [#allocation4], 0
      %s24 = sshll.u32 %s0, 4
      %s25 = int_to_ptr.hbm [resolvable:$true] %s24
      %s26 = sshll.u32 [#allocation3], 4
      %s27 = int_to_ptr.vmem [resolvable:$true] %s26
      %29 = dma.hbm_to_vmem [thread:$0]  %s25, 128, %s27, [#allocation4]
    $region5: #{tpu_custom_call.1} parent=1 // pred_fallthru
      _
    // Predicated region
    $region6: #{tpu_custom_call.1} parent=1 // pred_check
      _
    $region7: #{tpu_custom_call.1} parent=1 // pred_check_branch
      %31 = sbr.rel (0) target = $region9
    $region8: #{tpu_custom_call.1} parent=1 // pred_region
      %33 = vsyncadd [#allocation7], 0
      %s35 = sshll.u32 %s1, 4
      %s36 = int_to_ptr.hbm [resolvable:$true] %s35
      %s37 = sshll.u32 [#allocation6], 4
      %s38 = int_to_ptr.vmem [resolvable:$true] %s37
      %40 = dma.hbm_to_vmem [thread:$0]  %s36, 128, %s38, [#allocation7]
    $region9: #{tpu_custom_call.1} parent=1 // pred_fallthru
      _
    // Predicated region
    $region10: #{tpu_custom_call.1} parent=1 // pred_check
      _
    $region11: #{tpu_custom_call.1} parent=1 // pred_check_branch
      %42 = sbr.rel (0) target = $region13
    $region12: #{tpu_custom_call.1} parent=1 // pred_region
      %44 = vsyncadd [#allocation7], 0
      %s45 = sshll.u32 %s2, 4
      %s46 = int_to_ptr.hbm [resolvable:$true] %s45
      %s47 = sshll.u32 [#allocation8], 4
      %s48 = int_to_ptr.vmem [resolvable:$true] %s47
      %53 = dma.hbm_to_vmem [thread:$0]  %s46, 384, %s48, [#allocation7], 128, 128, 8
    $region13: #{tpu_custom_call.1} parent=1 // pred_fallthru
      _
    // Predicated region
    $region14: #{tpu_custom_call.1} parent=1 // pred_check
      _
    $region15: #{tpu_custom_call.1} parent=1 // pred_check_branch
      %55 = sbr.rel (0) target = $region17
    $region16: #{tpu_custom_call.1} parent=1 // pred_region
      %57 = vsyncadd [#allocation10], 0
      %s59 = sshll.u32 %s3, 4
      %s60 = int_to_ptr.hbm [resolvable:$true] %s59
      %s61 = sshll.u32 [#allocation9], 4
      %s62 = int_to_ptr.vmem [resolvable:$true] %s61
      %64 = dma.hbm_to_vmem [thread:$0]  %s60, 128, %s62, [#allocation10]
    $region17: #{tpu_custom_call.1} parent=1 // pred_fallthru
      _
    // Predicated region
    $region18: #{tpu_custom_call.1} parent=1 // pred_check
      _
    $region19: #{tpu_custom_call.1} parent=1 // pred_check_branch
      %66 = sbr.rel (0) target = $region21
    $region20: #{tpu_custom_call.1} parent=1 // pred_region
      _
    $region21: #{tpu_custom_call.1} parent=1 // pred_fallthru
      _
    // Predicated region
    $region22: #{tpu_custom_call.1} parent=1 // pred_check
      _
    $region23: #{tpu_custom_call.1} parent=1 // pred_check_branch
      %68 = sbr.rel (0) target = $region25
    $region24: #{tpu_custom_call.1} parent=1 // pred_region
      %70 = vsyncadd [#allocation10], 0
      %s71 = sshll.u32 %s5, 4
      %s72 = int_to_ptr.hbm [resolvable:$true] %s71
      %s73 = sshll.u32 [#allocation11], 4
      %s74 = int_to_ptr.vmem [resolvable:$true] %s73
      %79 = dma.hbm_to_vmem [thread:$0]  %s72, 2048, %s74, [#allocation10], 128, 128, 8
    $region25: #{tpu_custom_call.1} parent=1 // pred_fallthru
      _
    // Predicated region
    $region26: #{tpu_custom_call.1} parent=1 // pred_check
      _
    $region27: #{tpu_custom_call.1} parent=1 // pred_check_branch
      %81 = sbr.rel (0) target = $region29
    $region28: #{tpu_custom_call.1} parent=1 // pred_region
      _
    $region29: #{tpu_custom_call.1} parent=1 // pred_fallthru
      _
    // Predicated region
    $region30: #{tpu_custom_call.1} parent=1 // pred_check
      _
    $region31: #{tpu_custom_call.1} parent=1 // pred_check_branch
      %83 = sbr.rel (0) target = $region33
    $region32: #{tpu_custom_call.1} parent=1 // pred_region
      _
    $region33: #{tpu_custom_call.1} parent=1 // pred_fallthru
      _
    // Predicated region
    $region34: #{tpu_custom_call.1} parent=1 // pred_check
      _
    $region35: #{tpu_custom_call.1} parent=1 // pred_check_branch
      %85 = sbr.rel (0) target = $region37
    $region36: #{tpu_custom_call.1} parent=1 // pred_region
      _
    $region37: #{tpu_custom_call.1} parent=1 // pred_fallthru
      _
    // Predicated region
    $region38: #{tpu_custom_call.1} parent=1 // pred_check
      _
    $region39: #{tpu_custom_call.1} parent=1 // pred_check_branch
      %87 = sbr.rel (0) target = $region41
    $region40: #{tpu_custom_call.1} parent=1 // pred_region
      %89 = dma.done [#allocation4], 128
    $region41: #{tpu_custom_call.1} parent=1 // pred_fallthru
      _
    // Predicated region
    $region42: #{tpu_custom_call.1} parent=1 // pred_check
      _
    $region43: #{tpu_custom_call.1} parent=1 // pred_check_branch
      %91 = sbr.rel (0) target = $region45
    $region44: #{tpu_custom_call.1} parent=1 // pred_region
      %93 = dma.done [#allocation7], 128
    $region45: #{tpu_custom_call.1} parent=1 // pred_fallthru
      _
    // Predicated region
    $region46: #{tpu_custom_call.1} parent=1 // pred_check
      _
    $region47: #{tpu_custom_call.1} parent=1 // pred_check_branch
      %95 = sbr.rel (0) target = $region49
    $region48: #{tpu_custom_call.1} parent=1 // pred_region
      %97 = dma.done [#allocation7], 384
    $region49: #{tpu_custom_call.1} parent=1 // pred_fallthru
      _
    // Predicated region
    $region50: #{tpu_custom_call.1} parent=1 // pred_check
      _
    $region51: #{tpu_custom_call.1} parent=1 // pred_check_branch
      %99 = sbr.rel (0) target = $region53
    $region52: #{tpu_custom_call.1} parent=1 // pred_region
      %101 = dma.done [#allocation10], 128
    $region53: #{tpu_custom_call.1} parent=1 // pred_fallthru
      _
    // Predicated region
    $region54: #{tpu_custom_call.1} parent=1 // pred_check
      _
    $region55: #{tpu_custom_call.1} parent=1 // pred_check_branch
      %103 = sbr.rel (0) target = $region57
    $region56: #{tpu_custom_call.1} parent=1 // pred_region
      %105 = dma.done [#allocation10], 2048
    $region57: #{tpu_custom_call.1} parent=1 // pred_fallthru
      _
    %v106 = vld [vmem:[#allocation3] sm:$0xff]
    %v107 = vld [vmem:[#allocation8] sm:$0xff]
    %v108 = vld [vmem:[#allocation8 + $0x8] sm:$0xff]
    %v109 = vld [vmem:[#allocation8 + $0x10] sm:$0xff]
    %v110 = vld [vmem:[#allocation6] sm:$0xff]
    %v111 = vld [vmem:[#allocation9] sm:$0xff]
    %vm112 = vcmask 64512
    %v114 = vsel %vm112, %v110, 0
    %116 = vmatpush.msra.mxu0 0.0
    %117 = vmatpush.msra.mxu0 0.0
    %118 = vmatpush.msra.mxu0 0.0
    %119 = vmatpush.msra.mxu0 0.0
    %120 = vmatpush.msra.mxu0 0.0
    %121 = vmatpush.msra.mxu0 0.0
    %122 = vmatpush.msra.mxu0 0.0
    %123 = vmatpush.msra.mxu0 0.0
    %124 = vmatpush.msra.mxu0 0.0
    %125 = vmatpush.msra.mxu0 0.0
    %126 = vmatpush.msra.mxu0 0.0
    %127 = vmatpush.msra.mxu0 0.0
    %128 = vmatpush.msra.mxu0 0.0
    %129 = vmatpush.msra.mxu0 0.0
    %130 = vmatpush.msra.mxu0 0.0
    %131 = vmatpush.msra.mxu0 %v111
    %132 = vmatmul.f32.gmra.mxu0 %v114
    %v133 = vpop.f32.mrf.mxu0
    %v134 = vadd.f32 0.0, %v133
    %135 = vdwg.mxu0
    %vm136 = vcmask 195584
    %v138 = vsel %vm136, %v106, 0
    %140 = vmatpush.msra.mxu0 0.0
    %141 = vmatpush.msra.mxu0 0.0
    %142 = vmatpush.msra.mxu0 0.0
    %143 = vmatpush.msra.mxu0 0.0
    %144 = vmatpush.msra.mxu0 0.0
    %145 = vmatpush.msra.mxu0 0.0
    %146 = vmatpush.msra.mxu0 0.0
    %147 = vmatpush.msra.mxu0 0.0
    %148 = vmatpush.msra.mxu0 0.0
    %149 = vmatpush.msra.mxu0 0.0
    %150 = vmatpush.msra.mxu0 0.0
    %151 = vmatpush.msra.mxu0 0.0
    %152 = vmatpush.msra.mxu0 0.0
    %153 = vmatpush.msra.mxu0 %v109
    %154 = vmatpush.msra.mxu0 %v108
    %155 = vmatpush.msra.mxu0 %v107
    %156 = vmatmul.f32.gmra.mxu0 %v138
    %v157 = vpop.f32.mrf.mxu0
    %v158 = vadd.f32 %v134, %v157
    %159 = vdwg.mxu0
    %v160 = vld [vmem:[%s4] sm:$0x1]
    %v162 = vperm.slane %v160, 0
    %v164 = vadd.f32 %v158, %v162
    %v165 = vmax.f32 %v164, 0.0
    %v166 = vld [vmem:[#allocation11] sm:$0xff]
    %v167 = vld [vmem:[#allocation11 + $0x8] sm:$0xff]
    %v168 = vld [vmem:[#allocation11 + $0x10] sm:$0xff]
    %v169 = vld [vmem:[#allocation11 + $0x18] sm:$0xff]
    %v170 = vld [vmem:[#allocation11 + $0x20] sm:$0xff]
    %v171 = vld [vmem:[#allocation11 + $0x28] sm:$0xff]
    %v172 = vld [vmem:[#allocation11 + $0x30] sm:$0xff]
    %v173 = vld [vmem:[#allocation11 + $0x38] sm:$0xff]
    %v174 = vld [vmem:[#allocation11 + $0x40] sm:$0xff]
    %v175 = vld [vmem:[#allocation11 + $0x48] sm:$0xff]
    %v176 = vld [vmem:[#allocation11 + $0x50] sm:$0xff]
    %v177 = vld [vmem:[#allocation11 + $0x58] sm:$0xff]
    %v178 = vld [vmem:[#allocation11 + $0x60] sm:$0xff]
    %v179 = vld [vmem:[#allocation11 + $0x68] sm:$0xff]
    %v180 = vld [vmem:[#allocation11 + $0x70] sm:$0xff]
    %v181 = vld [vmem:[#allocation11 + $0x78] sm:$0xff]
    %v182 = vld [vmem:[%s6] sm:$0x1]
    %v184 = vperm.slane %v182, 0
    %186 = vmatpush.msra.mxu0 %v181
    %187 = vmatpush.msra.mxu0 %v180
    %188 = vmatpush.msra.mxu0 %v179
    %189 = vmatpush.msra.mxu0 %v178
    %190 = vmatpush.msra.mxu0 %v177
    %191 = vmatpush.msra.mxu0 %v176
    %192 = vmatpush.msra.mxu0 %v175
    %193 = vmatpush.msra.mxu0 %v174
    %194 = vmatpush.msra.mxu0 %v173
    %195 = vmatpush.msra.mxu0 %v172
    %196 = vmatpush.msra.mxu0 %v171
    %197 = vmatpush.msra.mxu0 %v170
    %198 = vmatpush.msra.mxu0 %v169
    %199 = vmatpush.msra.mxu0 %v168
    %200 = vmatpush.msra.mxu0 %v167
    %201 = vmatpush.msra.mxu0 %v166
    %202 = vmatmul.f32.gmra.mxu0 %v165
    %v203 = vpop.f32.mrf.mxu0
    %v204 = vadd.f32 %v184, %v203
    %205 = vdwg.mxu0
    %v206 = vmax.f32 %v204, 0.0
    %v207 = vld [vmem:[%s7] sm:$0x1]
    %s208 = sld [smem:[#allocation2]]
    %v209 = vstv %s208
    %210 = vmatpush.xpose.msra.mxu0 0.0
    %211 = vmatpush.xpose.msra.mxu0 0.0
    %212 = vmatpush.xpose.msra.mxu0 0.0
    %213 = vmatpush.xpose.msra.mxu0 0.0
    %214 = vmatpush.xpose.msra.mxu0 0.0
    %215 = vmatpush.xpose.msra.mxu0 0.0
    %216 = vmatpush.xpose.msra.mxu0 0.0
    %217 = vmatpush.xpose.msra.mxu0 0.0
    %218 = vmatpush.xpose.msra.mxu0 0.0
    %219 = vmatpush.xpose.msra.mxu0 0.0
    %220 = vmatpush.xpose.msra.mxu0 0.0
    %221 = vmatpush.xpose.msra.mxu0 0.0
    %222 = vmatpush.xpose.msra.mxu0 0.0
    %223 = vmatpush.xpose.msra.mxu0 0.0
    %224 = vmatpush.xpose.msra.mxu0 0.0
    %225 = vmatpush.xpose.msra.mxu0 %v206
    %226 = vmatmul.f32.gmra.mxu0 %v207
    %v227 = vpop.f32.mrf.mxu0
    %v228 = vadd.f32 %v209, %v227
    %229 = vdwg.mxu0
    %vm230 = vcmask 57344
    %231 = vst.msk [vmem:[#allocation12] sm:$0x1] %vm230, %v228
    // Predicated region
    $region58: #{tpu_custom_call.1} parent=1 // pred_check
      _
    $region59: #{tpu_custom_call.1} parent=1 // pred_check_branch
      %233 = sbr.rel (0) target = $region61
    $region60: #{tpu_custom_call.1} parent=1 // pred_region
      %235 = vsyncadd [#allocation5], 0
      %s237 = sshll.u32 [#allocation12], 4
      %s238 = int_to_ptr.vmem [resolvable:$true] %s237
      %s239 = sshll.u32 %s9, 4
      %s240 = int_to_ptr.hbm [resolvable:$true] %s239
      %242 = dma.vmem_to_hbm [thread:$0]  %s238, 16, %s240, [#allocation5]
    $region61: #{tpu_custom_call.1} parent=1 // pred_fallthru
      _
    // Predicated region
    $region62: #{tpu_custom_call.1} parent=1 // pred_check
      _
    $region63: #{tpu_custom_call.1} parent=1 // pred_check_branch
      %244 = sbr.rel (0) target = $region65
    $region64: #{tpu_custom_call.1} parent=1 // pred_region
      %246 = dma.done [#allocation5], 16
    $region65: #{tpu_custom_call.1} parent=1 // pred_fallthru
      _
    %247 = vsyncpa [#allocation4], 1
    %248 = vsyncpa [#allocation7], 1
    %249 = vsyncpa [#allocation10], 1
    %250 = vsyncpa [#allocation5], 1

</llo_original>
